<compile_context>
chip_gen: v6e
topology: v6e:2x2x1
jax: 0.10.0
libtpu: 0.0.40
codegen_flags: <defaults>
</compile_context>

<pallas_src>
import jax
import jax.numpy as jnp
from jax.experimental import pallas as pl
from jax.experimental.pallas import tpu as pltpu

LN_EPS = 1e-5  # torch.nn.LayerNorm default


def _round_up(n, m):
    return (n + m - 1) // m * m


def _tpu_vmem_bytes():
    # Per-TensorCore VMEM capacity (64 MiB on v7x, 128 MiB on v5e/v6e).
    try:
        return int(pltpu.get_tpu_info().vmem_capacity_bytes)
    except Exception:
        return 64 << 20  # conservative fallback


def prenorm_linear_kernel(x_ref, g_ref, b_ref, w_ref, wb_ref, o_ref):
    # x_ref : (tm, D)   token rows (full D -> LayerNorm over full feature dim)
    # g_ref : (1, D)    LayerNorm gamma (f32)
    # b_ref : (1, D)    LayerNorm beta  (f32)
    # w_ref : (D, tn)   Linear weight tile (bf16 -> MXU fast path)
    # wb_ref: (1, tn)   Linear bias tile (f32)
    # o_ref : (tm, tn)
    x = x_ref[...].astype(jnp.float32)

    # LayerNorm over last dim (biased variance, matches torch.nn.LayerNorm).
    mean = jnp.mean(x, axis=-1, keepdims=True)
    var = jnp.mean((x - mean) ** 2, axis=-1, keepdims=True)
    y = (x - mean) * jax.lax.rsqrt(var + LN_EPS)
    y = y * g_ref[...] + b_ref[...]

    # fn = Linear(D -> H) on the MXU; bf16 operands, f32 accumulation.
    out = jnp.dot(y.astype(w_ref.dtype), w_ref[...],
                  preferred_element_type=jnp.float32)
    out = out + wb_ref[...]
    o_ref[...] = out.astype(o_ref.dtype)


def prenorm_forward(x, gamma, beta, w, wb, *, tm=None, tn=None,
                    compute_dtype=jnp.bfloat16):
    """x: (..., D) -> (..., H). Equivalent to fn(LayerNorm(dim)(x)) with
    fn = Linear(D, H)."""
    *lead, D = x.shape
    H = w.shape[1]
    N = 1
    for d in lead:
        N *= d
    N = int(N)

    out_dtype = x.dtype
    x_item = jnp.dtype(x.dtype).itemsize
    w_item = jnp.dtype(compute_dtype).itemsize
    o_item = jnp.dtype(out_dtype).itemsize

    vmem_cap = _tpu_vmem_bytes()
    budget = int(0.80 * vmem_cap)        # what we aim to actually use
    resident_cap = int(0.45 * vmem_cap)  # max size of a VMEM-resident weight

    # Sublane packing: bf16 packs 16 rows per vreg, f32 packs 8.
    sub = 16 if x.dtype == jnp.bfloat16 else 8

    H_full = _round_up(H, 128)                  # lane-dense hidden dim
    w_resident_bytes = D * H_full * w_item

    # --- tn / weight-residency decision -------------------------------------
    if tn is None:
        weight_resident = w_resident_bytes <= resident_cap
        tn_eff = H_full if weight_resident else min(512, H_full)
    else:
        tn_eff = min(_round_up(tn, 128), H_full)
        weight_resident = tn_eff >= H_full
    H_pad = _round_up(H, tn_eff)

    # --- tm: big token tiles amortize per-grid-step overhead ----------------
    if tm is None:
        tm = 512
    tm = max(sub, min(_round_up(tm, sub), _round_up(N, sub)))

    def est(tm_, tn_):
        # double-buffered x / weight / output blocks
        blocks = 2 * (tm_ * D * x_item + D * tn_ * w_item + tm_ * tn_ * o_item)
        # in-kernel f32 x and y copies, bf16 y, f32 dot accumulator
        inter = 2 * tm_ * D * 4 + tm_ * D * w_item + tm_ * tn_ * 4
        return blocks + inter + (2 << 20)       # small fixed margin

    while est(tm, tn_eff) > budget and tm > sub:
        tm = max(sub, _round_up(tm // 2, sub))

    # Resident weight alone too big for the budget -> stream it once instead.
    if est(tm, tn_eff) > budget and weight_resident and H_full > 128:
        weight_resident = False
        tn_eff = min(512, H_full)
        H_pad = _round_up(H, tn_eff)
        while est(tm, tn_eff) > budget and tm > sub:
            tm = max(sub, _round_up(tm // 2, sub))
        while est(tm, tn_eff) > budget and tn_eff > 128:
            tn_eff = max(128, _round_up(tn_eff // 2, 128))
            H_pad = _round_up(H, tn_eff)

    # v7x has 2 TensorCores: keep at least 2 token tiles when possible so the
    # "parallel" token axis can be sharded across both.
    if _round_up(N, tm) // tm < 2 and tm >= 2 * sub:
        tm = max(sub, _round_up(tm // 2, sub))

    N_pad = _round_up(N, tm)

    # --- pad operands ---------------------------------------------------------
    xf = x.reshape(N, D)
    if N_pad != N:
        xf = jnp.pad(xf, ((0, N_pad - N), (0, 0)))

    w_c = w.astype(compute_dtype)               # bf16 MXU fast path
    wb_f = wb.astype(jnp.float32)
    if H_pad != H:
        w_c = jnp.pad(w_c, ((0, 0), (0, H_pad - H)))
        wb_f = jnp.pad(wb_f, ((0, H_pad - H),))

    g2 = gamma.astype(jnp.float32).reshape(1, D)
    b2 = beta.astype(jnp.float32).reshape(1, D)
    wb2 = wb_f.reshape(1, H_pad)

    # --- grid / specs ---------------------------------------------------------
    if weight_resident:
        # 1-D grid over token tiles; weight block index is constant (0, 0),
        # so the weight is DMA'd once and stays resident in VMEM.
        grid = (N_pad // tm,)
        in_specs = [
            pl.BlockSpec((tm, D), lambda i: (i, 0)),        # x rows
            pl.BlockSpec((1, D), lambda i: (0, 0)),         # gamma
            pl.BlockSpec((1, D), lambda i: (0, 0)),         # beta
            pl.BlockSpec((D, H_pad), lambda i: (0, 0)),     # full weight
            pl.BlockSpec((1, H_pad), lambda i: (0, 0)),     # bias
        ]
        out_specs = pl.BlockSpec((tm, H_pad), lambda i: (i, 0))
        dims = ("parallel",)
        x_reads = 1
        ln_rows = N_pad
    else:
        # Hidden axis OUTER, token axis inner: the weight block index depends
        # only on the outer axis, so the full weight streams exactly once.
        grid = (H_pad // tn_eff, N_pad // tm)
        in_specs = [
            pl.BlockSpec((tm, D), lambda j, i: (i, 0)),     # x rows
            pl.BlockSpec((1, D), lambda j, i: (0, 0)),      # gamma
            pl.BlockSpec((1, D), lambda j, i: (0, 0)),      # beta
            pl.BlockSpec((D, tn_eff), lambda j, i: (0, j)),  # weight tile
            pl.BlockSpec((1, tn_eff), lambda j, i: (0, j)),  # bias tile
        ]
        out_specs = pl.BlockSpec((tm, tn_eff), lambda j, i: (i, j))
        dims = ("parallel", "parallel")
        x_reads = H_pad // tn_eff
        ln_rows = N_pad * (H_pad // tn_eff)

    cost = pl.CostEstimate(
        flops=2 * N_pad * D * H_pad,
        transcendentals=ln_rows,
        bytes_accessed=int(x_reads * N_pad * D * x_item
                           + D * H_pad * w_item
                           + N_pad * H_pad * o_item),
    )

    vmem_limit = int(min(max(2 * est(tm, tn_eff), 32 << 20),
                         int(0.9 * vmem_cap)))

    out_flat = pl.pallas_call(
        prenorm_linear_kernel,
        out_shape=jax.ShapeDtypeStruct((N_pad, H_pad), out_dtype),
        grid_spec=pltpu.PrefetchScalarGridSpec(
            num_scalar_prefetch=0,
            grid=grid,
            in_specs=in_specs,
            out_specs=out_specs,
        ),
        compiler_params=pltpu.CompilerParams(
            dimension_semantics=dims,
            vmem_limit_bytes=vmem_limit),
        cost_estimate=cost,
    )(xf, g2, b2, w_c, wb2)

    return out_flat[:N, :H].reshape(*lead, H)


def reference_forward(x, gamma, beta, w, wb, compute_dtype=jnp.bfloat16):
    """Matched-precision reference: f32 LayerNorm, bf16 matmul w/ f32 accum."""
    x32 = x.astype(jnp.float32)
    mean = jnp.mean(x32, axis=-1, keepdims=True)
    var = jnp.mean((x32 - mean) ** 2, axis=-1, keepdims=True)
    y = (x32 - mean) / jnp.sqrt(var + LN_EPS) * gamma + beta
    out = jnp.dot(y.astype(compute_dtype), w.astype(compute_dtype),
                  preferred_element_type=jnp.float32) + wb
    return out.astype(x.dtype)


def _run_case(key, B, S, D, H):
    k0, k1, k2, k3, k4 = jax.random.split(key, 5)
    x = jax.random.normal(k0, (B, S, D), dtype=jnp.float32)
    gamma = 1.0 + 0.1 * jax.random.normal(k1, (D,), dtype=jnp.float32)
    beta = 0.1 * jax.random.normal(k2, (D,), dtype=jnp.float32)
    w = jax.random.normal(k3, (D, H), dtype=jnp.float32) / jnp.sqrt(D)
    wb = 0.1 * jax.random.normal(k4, (H,), dtype=jnp.float32)

    out = jax.block_until_ready(prenorm_forward(x, gamma, beta, w, wb))
    ref = reference_forward(x, gamma, beta, w, wb)
    assert out.shape == (B, S, H)
    assert jnp.allclose(out, ref, atol=2e-2, rtol=2e-2), "mismatch vs reference"


if __name__ == "__main__":
    key = jax.random.PRNGKey(0)
    k_a, k_b = jax.random.split(key)

    # Small canonical case (matches the module's toy config).
    _run_case(k_a, B=2, S=8, D=32, H=32)
    # Ragged case: token count not a multiple of the tile, H not a multiple
    # of 128 -> exercises the padding / lane-dense output path.
    _run_case(k_b, B=2, S=7, D=48, H=96)

    # TODO(synk): PreNorm's wrapped `fn` is arbitrary in PyTorch; only the common
    # Linear projection is fused here. Other `fn`s would need their own kernels.
    print("KERNEL_OK")
</pallas_src>

<mosaic_0001>
module attributes {stable_mosaic.version = 11 : i64} {
  func.func @prenorm_linear_kernel(%arg0: i32, %arg1: memref<8x32xf32, #tpu.memory_space<vmem>>, %arg2: memref<1x32xf32, #tpu.memory_space<vmem>>, %arg3: memref<1x32xf32, #tpu.memory_space<vmem>>, %arg4: memref<32x128xbf16, #tpu.memory_space<vmem>>, %arg5: memref<1x128xf32, #tpu.memory_space<vmem>>, %arg6: memref<8x128xf32, #tpu.memory_space<vmem>>) attributes {dimension_semantics = [#tpu.dimension_semantics<parallel>], iteration_bounds = array<i64: 2>, scalar_prefetch = 0 : i64, scratch_operands = 0 : i64, tpu.core_type = #tpu.core_type<tc>, window_params = [{transform_indices = @transform_0, window_bounds = array<i64: 8, 32>}, {pipeline_mode = #tpu.pipeline_mode<synchronous>, transform_indices = @transform_1, window_bounds = array<i64: 1, 32>}, {pipeline_mode = #tpu.pipeline_mode<synchronous>, transform_indices = @transform_2, window_bounds = array<i64: 1, 32>}, {pipeline_mode = #tpu.pipeline_mode<synchronous>, transform_indices = @transform_3, window_bounds = array<i64: 32, 128>}, {pipeline_mode = #tpu.pipeline_mode<synchronous>, transform_indices = @transform_4, window_bounds = array<i64: 1, 128>}, {transform_indices = @transform_5, window_bounds = array<i64: 8, 128>}]} {
    %c0 = arith.constant 0 : index
    %c0_0 = arith.constant 0 : index
    %0 = vector.load %arg1[%c0, %c0_0] : memref<8x32xf32, #tpu.memory_space<vmem>>, vector<8x32xf32>
    %cst = arith.constant dense<0.000000e+00> : vector<8xf32>
    %1 = vector.multi_reduction <add>, %0, %cst [1] : vector<8x32xf32> to vector<8xf32>
    %2 = vector.shape_cast %1 : vector<8xf32> to vector<8x1xf32>
    %cst_1 = arith.constant 3.200000e+01 : f32
    %3 = vector.broadcast %cst_1 : f32 to vector<8x1xf32>
    %4 = arith.divf %2, %3 : vector<8x1xf32>
    %5 = vector.broadcast %4 : vector<8x1xf32> to vector<8x32xf32>
    %6 = arith.subf %0, %5 : vector<8x32xf32>
    %7 = arith.mulf %6, %6 : vector<8x32xf32>
    %cst_2 = arith.constant dense<0.000000e+00> : vector<8xf32>
    %8 = vector.multi_reduction <add>, %7, %cst_2 [1] : vector<8x32xf32> to vector<8xf32>
    %9 = vector.shape_cast %8 : vector<8xf32> to vector<8x1xf32>
    %cst_3 = arith.constant 3.200000e+01 : f32
    %10 = vector.broadcast %cst_3 : f32 to vector<8x1xf32>
    %11 = arith.divf %9, %10 : vector<8x1xf32>
    %12 = vector.broadcast %4 : vector<8x1xf32> to vector<8x32xf32>
    %13 = arith.subf %0, %12 : vector<8x32xf32>
    %cst_4 = arith.constant 9.99999974E-6 : f32
    %14 = vector.broadcast %cst_4 : f32 to vector<8x1xf32>
    %15 = arith.addf %11, %14 : vector<8x1xf32>
    %16 = math.rsqrt %15 : vector<8x1xf32>
    %17 = vector.broadcast %16 : vector<8x1xf32> to vector<8x32xf32>
    %18 = arith.mulf %13, %17 : vector<8x32xf32>
    %c0_5 = arith.constant 0 : index
    %c0_6 = arith.constant 0 : index
    %19 = vector.load %arg2[%c0_5, %c0_6] : memref<1x32xf32, #tpu.memory_space<vmem>>, vector<1x32xf32>
    %20 = vector.broadcast %19 : vector<1x32xf32> to vector<8x32xf32>
    %21 = arith.mulf %18, %20 : vector<8x32xf32>
    %c0_7 = arith.constant 0 : index
    %c0_8 = arith.constant 0 : index
    %22 = vector.load %arg3[%c0_7, %c0_8] : memref<1x32xf32, #tpu.memory_space<vmem>>, vector<1x32xf32>
    %23 = vector.broadcast %22 : vector<1x32xf32> to vector<8x32xf32>
    %24 = arith.addf %21, %23 : vector<8x32xf32>
    %25 = arith.truncf %24 : vector<8x32xf32> to vector<8x32xbf16>
    %c0_9 = arith.constant 0 : index
    %c0_10 = arith.constant 0 : index
    %26 = vector.load %arg4[%c0_9, %c0_10] : memref<32x128xbf16, #tpu.memory_space<vmem>>, vector<32x128xbf16>
    %cst_11 = arith.constant dense<0.000000e+00> : vector<8x128xf32>
    %27 = tpu.matmul %25, %26, %cst_11 {dimension_numbers = #tpu.dot_dimension_numbers<[1], [0], [0], [1], [0, 0, 1, 1], [], []>} : vector<8x32xbf16>, vector<32x128xbf16>, vector<8x128xf32> -> vector<8x128xf32>
    %c0_12 = arith.constant 0 : index
    %c0_13 = arith.constant 0 : index
    %28 = vector.load %arg5[%c0_12, %c0_13] : memref<1x128xf32, #tpu.memory_space<vmem>>, vector<1x128xf32>
    %29 = vector.broadcast %28 : vector<1x128xf32> to vector<8x128xf32>
    %30 = arith.addf %27, %29 : vector<8x128xf32>
    %c0_14 = arith.constant 0 : index
    %c0_15 = arith.constant 0 : index
    %31 = vector.load %arg6[%c0_14, %c0_15] : memref<8x128xf32, #tpu.memory_space<vmem>>, vector<8x128xf32>
    tpu.vector_store %arg6[%c0_14, %c0_15], %30 {strides = array<i32>} : memref<8x128xf32, #tpu.memory_space<vmem>>, vector<8x128xf32>,
    return
  }
  func.func @transform_0(%arg0: i32) -> (i32, i32) {
    %c0_i32 = arith.constant 0 : i32
    %c0_i32_0 = arith.constant 0 : i32
    return %arg0, %c0_i32 : i32, i32
  }
  func.func @transform_1(%arg0: i32) -> (i32, i32) {
    %c0_i32 = arith.constant 0 : i32
    %c0_i32_0 = arith.constant 0 : i32
    %c0_i32_1 = arith.constant 0 : i32
    return %c0_i32, %c0_i32_0 : i32, i32
  }
  func.func @transform_2(%arg0: i32) -> (i32, i32) {
    %c0_i32 = arith.constant 0 : i32
    %c0_i32_0 = arith.constant 0 : i32
    %c0_i32_1 = arith.constant 0 : i32
    return %c0_i32, %c0_i32_0 : i32, i32
  }
  func.func @transform_3(%arg0: i32) -> (i32, i32) {
    %c0_i32 = arith.constant 0 : i32
    %c0_i32_0 = arith.constant 0 : i32
    %c0_i32_1 = arith.constant 0 : i32
    return %c0_i32, %c0_i32_0 : i32, i32
  }
  func.func @transform_4(%arg0: i32) -> (i32, i32) {
    %c0_i32 = arith.constant 0 : i32
    %c0_i32_0 = arith.constant 0 : i32
    %c0_i32_1 = arith.constant 0 : i32
    return %c0_i32, %c0_i32_0 : i32, i32
  }
  func.func @transform_5(%arg0: i32) -> (i32, i32) {
    %c0_i32 = arith.constant 0 : i32
    %c0_i32_0 = arith.constant 0 : i32
    return %arg0, %c0_i32 : i32, i32
  }
}

</mosaic_0001>

<llo_original>
// kernel: tpu_custom_call.1
$region0: #{tpu_custom_call.1}
  #allocation0 [shape = 'u32[]', space=smem, size = 0x4, offset = 0x4, fixed_abs, tag = 'smem constant byte address 0x4 - core index']
  #allocation1 [shape = 'u32[144,128]{1,0:T(1,128)}', space=vmem, size = 0x12000, scoped, tag = 'internal scratch']
  %s0 = inlined_call_operand.hbm [shape: f32[16,32], index: 0, kind: input, shape index: {}]
  %s1 = inlined_call_operand.vmem [shape: f32[1,32], index: 1, kind: input, shape index: {}]
  %s2 = inlined_call_operand.vmem [shape: f32[1,32], index: 2, kind: input, shape index: {}]
  %s3 = inlined_call_operand.hbm [shape: bf16[32,128], index: 3, kind: input, shape index: {}]
  %s4 = inlined_call_operand.vmem [shape: f32[1,128], index: 4, kind: input, shape index: {}]
  %s5 = inlined_call_operand.hbm [shape: f32[16,128], index: 5, kind: output, shape index: {}]
  %s6 = sld [smem:[#allocation0]]
  $region61: #{tpu_custom_call.1} parent=0
    _
  %s8 = ssub.s32 1, %s6
  %s9 = scalar_select 0, %s8, %s6
  $region1: #{tpu_custom_call.1} parent=0
    #allocation2 [shape = 'u8[8192]{0}', space=vmem, size = 0x2000, scoped, tag = 'input window, operand 0']
    #allocation3 [shape = 's32[2]{0}', space=sflag, size = 0x8, scoped, tag = 'scoped memory for tpu_custom_call.1']
    #allocation4 [shape = 's32[2]{0}', space=sflag, size = 0x8, scoped, tag = 'scoped memory for tpu_custom_call.1']
    #allocation5 [shape = 'u8[8192]{0}', space=vmem, size = 0x2000, scoped, tag = 'input window, operand 3, single buffered']
    #allocation6 [shape = 's32[1]{0}', space=sflag, size = 0x4, scoped, tag = 'scoped memory for tpu_custom_call.1']
    #allocation7 [shape = 'u8[8192]{0}', space=vmem, size = 0x2000, scoped, tag = 'output window, operand 0']
    %10 = vsyncpa [#allocation3], 0
    %s11 = scalar_lea.sflag [#allocation3], 1
    %12 = vsyncpa %s11, 0
    %13 = vsyncpa [#allocation6], 0
    %14 = vsyncpa [#allocation4], 0
    %s15 = scalar_lea.sflag [#allocation4], 1
    %16 = vsyncpa %s15, 0
    loop: start=0, step=1, limit=4
    $region2: #{tpu_custom_call.1} parent=1 // loop_pre_header
      _
    $region3: #{tpu_custom_call.1} parent=1 // loop_header
      %s18 = sphi 0, %s22
      %p19 = scmp.ge.s32.totalorder %s18, 4
      %s28 = sphi 0, %s30
      %s31 = sphi 0, %s28
      %s32 = sphi 0, %s31
      %s48 = sphi 0, %s32
      %s52 = sphi 0, %s52
      %s54 = sphi 0, %s52
      %s55 = sphi 0, %s54
      %s69 = sphi 0, %s55
      %s73 = sphi 0, %s73
      %s75 = sphi 0, %s73
      %s76 = sphi 0, %s75
      %s90 = sphi 0, %s76
      %s94 = sphi 0, %s94
      %s96 = sphi 0, %s94
      %s97 = sphi 0, %s96
      %s111 = sphi 0, %s97
      %s115 = sphi 0, %s115
      %s117 = sphi 0, %s115
      %s118 = sphi 0, %s117
      %s132 = sphi 0, %s118
      %s138 = sphi 0, %s140
      %s141 = sphi 0, %s138
      %s142 = sphi 0, %s141
      %s158 = sphi 0, %s142
    $region4: #{tpu_custom_call.1} parent=1 // loop_header_branch
      %21 = sbr.rel (%p19) target = $region8
    $region5: #{tpu_custom_call.1} parent=1 // loop_body
      %s23 = ssub.s32 %s18, 1
      %s24 = ssub.s32 %s18, 2
      %s25 = sadd.s32 %s18, 1
      %s26 = ssub.s32 %s18, %s25
      %p27 = scmp.eq.s32.totalorder %s26, 0
      %s29 = sadd.s32 %s28, 1
      %s30 = scalar_select %p27, %s28, %s29
      %p33 = pneg %p27
      %p34 = scmp.eq.s32.totalorder %s18, 1
      %p35 = por %p33, %p34
      %p36 = scmp.ne.s32.totalorder %s28, %s31
      %p37 = scmp.eq.s32.totalorder %s18, 0
      %p38 = por %p36, %p37
      %p39 = scmp.ne.s32.totalorder %s28, %s31
      %p40 = scmp.eq.s32.totalorder %s23, 1
      %p41 = por %p39, %p40
      %p42 = scmp.ne.s32.totalorder %s31, %s32
      %p43 = scmp.eq.s32.totalorder %s23, 0
      %p44 = por %p42, %p43
      %p45 = scmp.ne.s32.totalorder %s31, %s32
      %p46 = scmp.eq.s32.totalorder %s24, 1
      %p47 = por %p45, %p46
      %p49 = scmp.ne.s32.totalorder %s32, %s48
      %p50 = scmp.eq.s32.totalorder %s24, 0
      %p51 = por %p49, %p50
      %s53 = sadd.s32 %s52, 1
      %p56 = scmp.eq.s32.totalorder %s18, 1
      %p57 = scmp.ne.s32.totalorder %s52, %s54
      %p58 = scmp.eq.s32.totalorder %s18, 0
      %p59 = por %p57, %p58
      %p60 = scmp.ne.s32.totalorder %s52, %s54
      %p61 = scmp.eq.s32.totalorder %s23, 1
      %p62 = por %p60, %p61
      %p63 = scmp.ne.s32.totalorder %s54, %s55
      %p64 = scmp.eq.s32.totalorder %s23, 0
      %p65 = por %p63, %p64
      %p66 = scmp.ne.s32.totalorder %s54, %s55
      %p67 = scmp.eq.s32.totalorder %s24, 1
      %p68 = por %p66, %p67
      %p70 = scmp.ne.s32.totalorder %s55, %s69
      %p71 = scmp.eq.s32.totalorder %s24, 0
      %p72 = por %p70, %p71
      %s74 = sadd.s32 %s73, 1
      %p77 = scmp.eq.s32.totalorder %s18, 1
      %p78 = scmp.ne.s32.totalorder %s73, %s75
      %p79 = scmp.eq.s32.totalorder %s18, 0
      %p80 = por %p78, %p79
      %p81 = scmp.ne.s32.totalorder %s73, %s75
      %p82 = scmp.eq.s32.totalorder %s23, 1
      %p83 = por %p81, %p82
      %p84 = scmp.ne.s32.totalorder %s75, %s76
      %p85 = scmp.eq.s32.totalorder %s23, 0
      %p86 = por %p84, %p85
      %p87 = scmp.ne.s32.totalorder %s75, %s76
      %p88 = scmp.eq.s32.totalorder %s24, 1
      %p89 = por %p87, %p88
      %p91 = scmp.ne.s32.totalorder %s76, %s90
      %p92 = scmp.eq.s32.totalorder %s24, 0
      %p93 = por %p91, %p92
      %s95 = sadd.s32 %s94, 1
      %p98 = scmp.eq.s32.totalorder %s18, 1
      %p99 = scmp.ne.s32.totalorder %s94, %s96
      %p100 = scmp.eq.s32.totalorder %s18, 0
      %p101 = por %p99, %p100
      %p102 = scmp.ne.s32.totalorder %s94, %s96
      %p103 = scmp.eq.s32.totalorder %s23, 1
      %p104 = por %p102, %p103
      %p105 = scmp.ne.s32.totalorder %s96, %s97
      %p106 = scmp.eq.s32.totalorder %s23, 0
      %p107 = por %p105, %p106
      %p108 = scmp.ne.s32.totalorder %s96, %s97
      %p109 = scmp.eq.s32.totalorder %s24, 1
      %p110 = por %p108, %p109
      %p112 = scmp.ne.s32.totalorder %s97, %s111
      %p113 = scmp.eq.s32.totalorder %s24, 0
      %p114 = por %p112, %p113
      %s116 = sadd.s32 %s115, 1
      %p119 = scmp.eq.s32.totalorder %s18, 1
      %p120 = scmp.ne.s32.totalorder %s115, %s117
      %p121 = scmp.eq.s32.totalorder %s18, 0
      %p122 = por %p120, %p121
      %p123 = scmp.ne.s32.totalorder %s115, %s117
      %p124 = scmp.eq.s32.totalorder %s23, 1
      %p125 = por %p123, %p124
      %p126 = scmp.ne.s32.totalorder %s117, %s118
      %p127 = scmp.eq.s32.totalorder %s23, 0
      %p128 = por %p126, %p127
      %p129 = scmp.ne.s32.totalorder %s117, %s118
      %p130 = scmp.eq.s32.totalorder %s24, 1
      %p131 = por %p129, %p130
      %p133 = scmp.ne.s32.totalorder %s118, %s132
      %p134 = scmp.eq.s32.totalorder %s24, 0
      %p135 = por %p133, %p134
      %s136 = ssub.s32 %s18, %s25
      %p137 = scmp.eq.s32.totalorder %s136, 0
      %s139 = sadd.s32 %s138, 1
      %s140 = scalar_select %p137, %s138, %s139
      %p143 = pneg %p137
      %p144 = scmp.eq.s32.totalorder %s18, 1
      %p145 = por %p143, %p144
      %p146 = scmp.ne.s32.totalorder %s138, %s141
      %p147 = scmp.eq.s32.totalorder %s18, 0
      %p148 = por %p146, %p147
      %p149 = scmp.ne.s32.totalorder %s138, %s141
      %p150 = scmp.eq.s32.totalorder %s23, 1
      %p151 = por %p149, %p150
      %p152 = scmp.ne.s32.totalorder %s141, %s142
      %p153 = scmp.eq.s32.totalorder %s23, 0
      %p154 = por %p152, %p153
      %p155 = scmp.ne.s32.totalorder %s141, %s142
      %p156 = scmp.eq.s32.totalorder %s24, 1
      %p157 = por %p155, %p156
      %p159 = scmp.ne.s32.totalorder %s142, %s158
      %p160 = scmp.eq.s32.totalorder %s24, 0
      %p161 = por %p159, %p160
      %p162 = scmp.le.s32.totalorder 1, %s18
      %p163 = scmp.lt.s32.totalorder %s18, 3
      %p164 = pnand %p162, %p163
      %p165 = pneg %p164
      // Predicated region
      $region9: #{tpu_custom_call.1} parent=5 // pred_check
        _
      $region10: #{tpu_custom_call.1} parent=5 // pred_check_branch
        %167 = sbr.rel (%p164) target = $region12
      $region11: #{tpu_custom_call.1} parent=5 // pred_region
        %s168 = ssub.s32 %s18, 1
        // Predicated region
        $region13: #{tpu_custom_call.1} parent=11 // pred_check
          %p169 = pneg %p65
        $region14: #{tpu_custom_call.1} parent=11 // pred_check_branch
          %171 = sbr.rel (%p169) target = $region16
        $region15: #{tpu_custom_call.1} parent=11 // pred_region
          _
        $region16: #{tpu_custom_call.1} parent=11 // pred_fallthru
          _
        // Predicated region
        $region17: #{tpu_custom_call.1} parent=11 // pred_check
          %p172 = pneg %p86
        $region18: #{tpu_custom_call.1} parent=11 // pred_check_branch
          %174 = sbr.rel (%p172) target = $region20
        $region19: #{tpu_custom_call.1} parent=11 // pred_region
          _
        $region20: #{tpu_custom_call.1} parent=11 // pred_fallthru
          _
        // Predicated region
        $region21: #{tpu_custom_call.1} parent=11 // pred_check
          %p175 = pneg %p107
        $region22: #{tpu_custom_call.1} parent=11 // pred_check_branch
          %177 = sbr.rel (%p175) target = $region24
        $region23: #{tpu_custom_call.1} parent=11 // pred_region
          %s179 = ssub.s32 256, 256
          %180 = vsyncadd [#allocation6], %s179
          %s181 = sshll.u32 [#allocation5], 4
          %s182 = int_to_ptr.vmem [resolvable:$true] %s181
          %187 = dma.hbm_to_vmem [thread:$0]  %s3, 256, %s182, [#allocation6], 64, 64, 4
        $region24: #{tpu_custom_call.1} parent=11 // pred_fallthru
          _
        // Predicated region
        $region25: #{tpu_custom_call.1} parent=11 // pred_check
          %p188 = pneg %p128
        $region26: #{tpu_custom_call.1} parent=11 // pred_check_branch
          %190 = sbr.rel (%p188) target = $region28
        $region27: #{tpu_custom_call.1} parent=11 // pred_region
          _
        $region28: #{tpu_custom_call.1} parent=11 // pred_fallthru
          _
      $region12: #{tpu_custom_call.1} parent=5 // pred_fallthru
        _
      %p191 = scmp.lt.s32.totalorder %s18, 2
      // Predicated region
      $region29: #{tpu_custom_call.1} parent=5 // pred_check
        %p192 = pneg %p191
      $region30: #{tpu_custom_call.1} parent=5 // pred_check_branch
        %194 = sbr.rel (%p192) target = $region32
      $region31: #{tpu_custom_call.1} parent=5 // pred_region
        // Predicated region
        $region33: #{tpu_custom_call.1} parent=31 // pred_check
          %p195 = pneg %p38
        $region34: #{tpu_custom_call.1} parent=31 // pred_check_branch
          %197 = sbr.rel (%p195) target = $region36
        $region35: #{tpu_custom_call.1} parent=31 // pred_region
          %s198 = sand.u32 %s28, 1
          %s199 = scalar_lea.sflag [#allocation3], %s198
          %s200 = sand.u32 %s28, 1
          %s201 = smul.addr %s200, 8
          %s202 = scalar_lea.vmem [#allocation2], %s201
          %s204 = ssub.s32 128, 128
          %205 = vsyncadd %s199, %s204
          %s206 = smul.addr %s18, 128
          %s207 = scalar_lea.hbm %s0, %s206
          %s209 = sshll.u32 %s202, 4
          %s210 = int_to_ptr.vmem [resolvable:$true] %s209
          %212 = dma.hbm_to_vmem [thread:$0]  %s207, 128, %s210, %s199
        $region36: #{tpu_custom_call.1} parent=31 // pred_fallthru
          _
      $region32: #{tpu_custom_call.1} parent=5 // pred_fallthru
        _
      %p213 = scmp.le.s32.totalorder 1, %s18
      %p214 = scmp.lt.s32.totalorder %s18, 3
      %p215 = pnand %p213, %p214
      %p216 = pneg %p215
      // Predicated region
      $region37: #{tpu_custom_call.1} parent=5 // pred_check
        _
      $region38: #{tpu_custom_call.1} parent=5 // pred_check_branch
        %218 = sbr.rel (%p215) target = $region40
      $region39: #{tpu_custom_call.1} parent=5 // pred_region
        %s219 = ssub.s32 %s18, 1
        %s220 = sand.u32 %s31, 1
        %s221 = scalar_lea.sflag [#allocation3], %s220
        %s222 = sand.u32 %s31, 1
        %s223 = smul.addr %s222, 8
        %s224 = scalar_lea.vmem [#allocation2], %s223
        // Predicated region
        $region41: #{tpu_custom_call.1} parent=39 // pred_check
          %p225 = pneg %p44
        $region42: #{tpu_custom_call.1} parent=39 // pred_check_branch
          %227 = sbr.rel (%p225) target = $region44
        $region43: #{tpu_custom_call.1} parent=39 // pred_region
          %228 = dma.done %s221, 128
        $region44: #{tpu_custom_call.1} parent=39 // pred_fallthru
          _
        // Predicated region
        $region45: #{tpu_custom_call.1} parent=39 // pred_check
          %p229 = pneg %p107
        $region46: #{tpu_custom_call.1} parent=39 // pred_check_branch
          %231 = sbr.rel (%p229) target = $region48
        $region47: #{tpu_custom_call.1} parent=39 // pred_region
          %232 = dma.done [#allocation6], 256
        $region48: #{tpu_custom_call.1} parent=39 // pred_fallthru
          _
        %s233 = sand.u32 %s31, 1
        %s234 = scalar_lea.sflag [#allocation3], %s233
        %s235 = sand.u32 %s31, 1
        %s236 = smul.addr %s235, 8
        %s237 = scalar_lea.vmem [#allocation2], %s236
        %p238 = pneg %p44
        %p239 = pneg %p41
        %p240 = pneg %p65
        %p241 = pneg %p62
        %p242 = pneg %p86
        %p243 = pneg %p83
        %p244 = pneg %p107
        %p245 = pneg %p104
        %p246 = pneg %p128
        %p247 = pneg %p125
        %p248 = pneg %p154
        %p249 = pneg %p151
        %s250 = sand.u32 %s141, 1
        %s251 = scalar_lea.sflag [#allocation4], %s250
        %s252 = sand.u32 %s141, 1
        %s253 = smul.addr %s252, 8
        %s254 = scalar_lea.vmem [#allocation7], %s253
        %v256 = vld [vmem:[%s224] sm:$0xff]
        %vm257 = vcmask 261120
        %v258 = vsel %vm257, %v256, 0.0
        %259 = vadd.xlane.f32.xlu0 %v258
        %v260 = vpop.xlane.xlu0 %259
        %v261 = vrcp.pop 32.0
        %v262 = vmul.f32 %v260, %v261
        %v263 = vsub.f32 %v256, %v262
        %v264 = vmul.f32 %v263, %v263
        %v265 = vsel %vm257, %v264, 0.0
        %266 = vadd.xlane.f32.xlu0 %v265
        %v267 = vpop.xlane.xlu0 %266
        %v268 = vmul.f32 %v267, %v261
        %v269 = vadd.f32 %v268, 1e-05
        %v270 = vrsqrt.pop %v269
        %v271 = vmul.f32 %v263, %v270
        %v272 = vld [vmem:[%s1] sm:$0x1]
        %v274 = vlaneseq
        %v275 = vshrl.u32 %v274, 7
        %v276 = vsub.s32 0, %v275
        %v277 = vrot.slane %v272, %v276
        %v279 = vmul.f32 %v271, %v277
        %v280 = vld [vmem:[%s2] sm:$0x1]
        %v282 = vlaneseq
        %v283 = vshrl.u32 %v282, 7
        %v284 = vsub.s32 0, %v283
        %v285 = vrot.slane %v280, %v284
        %v287 = vadd.f32 %v279, %v285
        %v288 = vpack.c.bf16 %v287, %v287
        %v289 = vld [vmem:[#allocation5] sm:$0xf]
        %v290 = vld [vmem:[#allocation5 + $0x4] sm:$0xf]
        %v291 = vld [vmem:[#allocation5 + $0x8] sm:$0xf]
        %v292 = vld [vmem:[#allocation5 + $0xc] sm:$0xf]
        %v293 = vld [vmem:[%s4] sm:$0x1]
        %v295 = vlaneseq
        %v296 = vshrl.u32 %v295, 7
        %v297 = vsub.s32 0, %v296
        %v298 = vrot.slane %v293, %v297
        %v304 = vunpack.c.l.b16 %v289
        %v305 = vunpack.c.l.b16 %v290
        %v306 = vunpack.c.l.b16 %v291
        %v307 = vunpack.c.l.b16 %v292
        %v308 = vpack.c.b16 %v305, %v304
        %v309 = vpack.c.b16 %v307, %v306
        %v313 = vsel %vm257, %v288, 0
        %315 = vmatprep.subr.bf16.mxu0 0
        %316 = vmatpush1.bf16.msra.mxu0 0
        %317 = vmatprep.subr.bf16.mxu0 0
        %318 = vmatpush1.bf16.msra.mxu0 0
        %319 = vmatprep.subr.bf16.mxu0 0
        %320 = vmatpush1.bf16.msra.mxu0 0
        %321 = vmatprep.subr.bf16.mxu0 0
        %322 = vmatpush1.bf16.msra.mxu0 0
        %323 = vmatprep.subr.bf16.mxu0 0
        %324 = vmatpush1.bf16.msra.mxu0 0
        %325 = vmatprep.subr.bf16.mxu0 0
        %326 = vmatpush1.bf16.msra.mxu0 0
        %327 = vmatprep.subr.bf16.mxu0 0
        %328 = vmatpush1.bf16.msra.mxu0 %v309
        %329 = vmatprep.subr.bf16.mxu0 0
        %330 = vmatpush1.bf16.msra.mxu0 %v308
        %331 = vmatprep.subr.bf16.mxu0 0
        %332 = vmatpush2.bf16.msra.mxu0 0
        %333 = vmatprep.subr.bf16.mxu0 0
        %334 = vmatpush2.bf16.msra.mxu0 0
        %335 = vmatprep.subr.bf16.mxu0 0
        %336 = vmatpush2.bf16.msra.mxu0 0
        %337 = vmatprep.subr.bf16.mxu0 0
        %338 = vmatpush2.bf16.msra.mxu0 0
        %339 = vmatprep.subr.bf16.mxu0 0
        %340 = vmatpush2.bf16.msra.mxu0 0
        %341 = vmatprep.subr.bf16.mxu0 0
        %342 = vmatpush2.bf16.msra.mxu0 0
        %343 = vmatprep.subr.bf16.mxu0 0
        %344 = vmatpush2.bf16.msra.mxu0 0
        %345 = vmatprep.subr.bf16.mxu0 0
        %346 = vmatpush2.bf16.msra.mxu0 0
        %347 = vmatprep.mubr.bf16.mxu0 0
        %348 = vmatmul.mubr.bf16.gmra.mxu0 %v313
        %v349 = vpop.f32.mrf.mxu0
        %v350 = vadd.f32 %v298, %v349
        %v351 = vpop.f32.mrf.mxu0
        %v352 = vpop.f32.mrf.mxu0
        %v353 = vpop.f32.mrf.mxu0
        %354 = vdwg.mxu0
        %355 = vst [vmem:[%s254] sm:$0xff] %v350
        %s356 = sand.u32 %s141, 1
        %s357 = scalar_lea.sflag [#allocation4], %s356
        %s358 = sand.u32 %s141, 1
        %s359 = smul.addr %s358, 8
        %s360 = scalar_lea.vmem [#allocation7], %s359
        // Predicated region
        $region49: #{tpu_custom_call.1} parent=39 // pred_check
          %p361 = pneg %p151
        $region50: #{tpu_custom_call.1} parent=39 // pred_check_branch
          %363 = sbr.rel (%p361) target = $region52
        $region51: #{tpu_custom_call.1} parent=39 // pred_region
          %s365 = ssub.s32 128, 128
          %366 = vsyncadd %s357, %s365
          %s367 = smul.addr %s23, 128
          %s368 = scalar_lea.hbm %s5, %s367
          %s370 = sshll.u32 %s360, 4
          %s371 = int_to_ptr.vmem [resolvable:$true] %s370
          %373 = dma.vmem_to_hbm [thread:$0]  %s371, 128, %s368, %s357
        $region52: #{tpu_custom_call.1} parent=39 // pred_fallthru
          _
      $region40: #{tpu_custom_call.1} parent=5 // pred_fallthru
        _
      %p374 = scmp.le.s32.totalorder 2, %s18
      // Predicated region
      $region53: #{tpu_custom_call.1} parent=5 // pred_check
        %p375 = pneg %p374
      $region54: #{tpu_custom_call.1} parent=5 // pred_check_branch
        %377 = sbr.rel (%p375) target = $region56
      $region55: #{tpu_custom_call.1} parent=5 // pred_region
        %s378 = ssub.s32 %s18, 2
        // Predicated region
        $region57: #{tpu_custom_call.1} parent=55 // pred_check
          %p379 = pneg %p157
        $region58: #{tpu_custom_call.1} parent=55 // pred_check_branch
          %381 = sbr.rel (%p379) target = $region60
        $region59: #{tpu_custom_call.1} parent=55 // pred_region
          %s382 = sand.u32 %s142, 1
          %s383 = scalar_lea.sflag [#allocation4], %s382
          %s384 = sand.u32 %s142, 1
          %s385 = smul.addr %s384, 8
          %s386 = scalar_lea.vmem [#allocation7], %s385
          %387 = dma.done %s383, 128
        $region60: #{tpu_custom_call.1} parent=55 // pred_fallthru
          _
      $region56: #{tpu_custom_call.1} parent=5 // pred_fallthru
        _
    $region6: #{tpu_custom_call.1} parent=1 // loop_footer
      %s22 = sadd.s32 1, %s18
    $region7: #{tpu_custom_call.1} parent=1 // loop_footer_branch
      %17 = sbr.rel target = $region3
    $region8: #{tpu_custom_call.1} parent=1 // loop_exit
      _
    %388 = vsyncpa [#allocation3], 1
    %s389 = scalar_lea.sflag [#allocation3], 1
    %390 = vsyncpa %s389, 1
    %391 = vsyncpa [#allocation6], 1
    %392 = vsyncpa [#allocation4], 1
    %s393 = scalar_lea.sflag [#allocation4], 1
    %394 = vsyncpa %s393, 1

</llo_original>
